<compile_context>
chip_gen: v5e
topology: v5e:2x2
jax: 0.10.0
libtpu: 0.0.40
codegen_flags: <defaults>
</compile_context>

<pallas_src>
import jax
import jax.numpy as jnp
from jax.experimental import pallas as pl
from jax.experimental.pallas import tpu as pltpu

LANE = 128  # TPU lane width


def _round_up(x, m):
    return (x + m - 1) // m * m


def _choose_tm(batch):
    """Batch-tile (sublane) size: big tiles for big batches, >=2 tiles when possible."""
    b16 = _round_up(max(batch, 1), 16)
    if b16 >= 512:
        return 256                        # fill the 256-wide MXU M dim (v6e/v7x)
    if b16 >= 32:
        return _round_up(b16 // 2, 16)    # >=2 grid tiles so v7x megacore splits the work
    return b16                            # tiny batch: single small tile


# ----------------------------- Pallas kernel --------------------------------
def vit_convformer_kernel(pooled_ref, w01_ref, b1_ref, w2_ref, b2_ref,
                          w3_ref, b3_ref, out_ref):
    # pooled_ref: [TM, K]    bf16  (mean-pooled im2col patches, K zero-padded to 128)
    # w01_ref:    [K, 512]   bf16  (linear backbone stand-in folded into fc1: wp @ w1)
    # b1_ref:     [1, 512]   f32
    # w2_ref:     [512, 256] bf16 ; b2_ref: [1, 256] f32
    # w3_ref:     [256, NCp] bf16 ; b3_ref: [1, NCp] f32  (NCp = num_classes padded to 128)
    # out_ref:    [TM, NCp]  f32   (lane-dense; real logits sliced outside)
    #
    # bf16 MXU operands with f32 accumulation; bias add + ReLU in f32 (v5e-friendly),
    # then immediate bf16 downcast to keep live intermediates small (vreg/VMEM pressure).

    h1 = jnp.dot(pooled_ref[...], w01_ref[...],
                 preferred_element_type=jnp.float32) + b1_ref[...]
    h1 = jnp.maximum(h1, 0.0).astype(jnp.bfloat16)

    h2 = jnp.dot(h1, w2_ref[...],
                 preferred_element_type=jnp.float32) + b2_ref[...]
    h2 = jnp.maximum(h2, 0.0).astype(jnp.bfloat16)

    logits = jnp.dot(h2, w3_ref[...],
                     preferred_element_type=jnp.float32) + b3_ref[...]

    out_ref[...] = logits.astype(out_ref.dtype)


# ------------------------- one-time parameter prep ---------------------------
def prepare_params(params):
    """Fold / pad / cast weights ONCE at parameter-load time (out of the per-call path)."""
    wp, w1, b1, w2, b2, w3, b3 = params
    K0, _F = wp.shape
    H1 = w1.shape[1]
    H2 = w2.shape[1]
    num_classes = w3.shape[1]
    K = _round_up(K0, LANE)              # contraction dim -> lane aligned
    NCp = _round_up(num_classes, LANE)   # lane-dense output (unmasked vst)

    # Fold the linear backbone stand-in into fc1 (no nonlinearity between them).
    w01 = (wp @ w1).astype(jnp.bfloat16)                                   # [K0, H1]
    w01_p = jnp.zeros((K, H1), jnp.bfloat16).at[:K0, :].set(w01)
    w2_b = w2.astype(jnp.bfloat16)
    w3_p = jnp.zeros((H2, NCp), jnp.bfloat16).at[:, :num_classes].set(w3.astype(jnp.bfloat16))
    b3_p = jnp.zeros((1, NCp), jnp.float32).at[:, :num_classes].set(b3)

    return {
        "w01": w01_p, "b1": b1, "w2": w2_b, "b2": b2, "w3": w3_p, "b3": b3_p,
        "K0": K0, "K": K, "H1": H1, "H2": H2,
        "num_classes": num_classes, "NCp": NCp,
    }


# ------------------------------- wrapper -------------------------------------
def vit_convformer_forward(x, prepared, patch=4):
    """x: [B, C, H, W] float32 (NCHW). Returns logits [B, num_classes]."""
    B, C, H, W = x.shape
    P = patch
    assert H % P == 0 and W % P == 0
    K0, K = prepared["K0"], prepared["K"]
    H1, H2 = prepared["H1"], prepared["H2"]
    num_classes, NCp = prepared["num_classes"], prepared["NCp"]
    assert K0 == C * P * P

    # ---- XLA glue: im2col + global average pool, folded in FRONT of the linear
    # backbone stand-in (algebraically valid only because it is linear).
    patches = x.reshape(B, C, H // P, P, W // P, P)
    patches = patches.transpose(0, 2, 4, 1, 3, 5).reshape(B, (H // P) * (W // P), K0)
    pooled = jnp.mean(patches, axis=1)                                   # [B, K0] f32

    # ---- activation-only padding: row tiles (sublane) + lane-aligned K
    TM = _choose_tm(B)
    B_pad = _round_up(B, TM)
    pooled_p = jnp.zeros((B_pad, K), jnp.bfloat16)
    pooled_p = pooled_p.at[:B, :K0].set(pooled.astype(jnp.bfloat16))

    grid = (B_pad // TM,)

    def const_spec(shape):
        # Weights/biases never change across the grid: keep them VMEM-resident and
        # single-buffered (double-buffering would only double their VMEM footprint).
        try:
            return pl.BlockSpec(shape, lambda i: (0, 0), pipeline_mode=pl.Buffered(1))
        except TypeError:  # older jax without the pipeline_mode kwarg
            return pl.BlockSpec(shape, lambda i: (0, 0))

    out_p = pl.pallas_call(
        vit_convformer_kernel,
        out_shape=jax.ShapeDtypeStruct((B_pad, NCp), jnp.float32),
        grid=grid,
        in_specs=[
            pl.BlockSpec((TM, K), lambda i: (i, 0)),        # pooled patches (row-tiled)
            const_spec((K, H1)), const_spec((1, H1)),       # fused backbone+fc1, b1
            const_spec((H1, H2)), const_spec((1, H2)),      # w2, b2
            const_spec((H2, NCp)), const_spec((1, NCp)),    # w3, b3 (padded to 128 cols)
        ],
        out_specs=pl.BlockSpec((TM, NCp), lambda i: (i, 0)),
        compiler_params=pltpu.CompilerParams(
            dimension_semantics=("parallel",)),             # batch tiles across TCs (v7x)
        # ~0.5 MiB of resident weights: default scoped VMEM is plenty on v5e/v6e/v7x.
    )(pooled_p, prepared["w01"], prepared["b1"], prepared["w2"],
      prepared["b2"], prepared["w3"], prepared["b3"])

    return out_p[:B, :num_classes]


# --------------------------- deterministic params ----------------------------
def xavier_uniform(key, fan_in, fan_out):
    limit = jnp.sqrt(6.0 / (fan_in + fan_out))
    return jax.random.uniform(key, (fan_in, fan_out), jnp.float32, -limit, limit)


def init_params(key, in_k, feature_dim, num_classes):
    k0, k1, k2, k3 = jax.random.split(key, 4)
    wp = 0.02 * jax.random.normal(k0, (in_k, feature_dim), jnp.float32)   # backbone stand-in
    w1 = xavier_uniform(k1, feature_dim, 512)
    b1 = jnp.zeros((1, 512), jnp.float32)
    w2 = xavier_uniform(k2, 512, 256)
    b2 = jnp.zeros((1, 256), jnp.float32)
    w3 = xavier_uniform(k3, 256, num_classes)
    b3 = jnp.zeros((1, num_classes), jnp.float32)
    return (wp, w1, b1, w2, b2, w3, b3)


# ------------------------------ reference (JAX, f32) --------------------------
def reference_forward(x, params, patch=4):
    B, C, H, W = x.shape
    P = patch
    patches = x.reshape(B, C, H // P, P, W // P, P)
    patches = patches.transpose(0, 2, 4, 1, 3, 5).reshape(B, (H // P) * (W // P), C * P * P)
    wp, w1, b1, w2, b2, w3, b3 = params
    feats = jnp.mean(patches @ wp, axis=1)             # original ordering (pool after backbone)
    h1 = jnp.maximum(feats @ w1 + b1, 0.0)
    h2 = jnp.maximum(h1 @ w2 + b2, 0.0)
    return h2 @ w3 + b3


if __name__ == "__main__":
    key = jax.random.PRNGKey(0)
    kx, kp = jax.random.split(key)

    # Small shapes consistent with the forward: image batch -> 9-class logits.
    B, C, H, W = 2, 3, 16, 16
    PATCH = 4
    FEATURE_DIM = 128          # stand-in for convformer_b36 head.fc.fc1.in_features
    NUM_CLASSES = 9

    x = jax.random.normal(kx, (B, C, H, W), jnp.float32)
    params = init_params(kp, C * PATCH * PATCH, FEATURE_DIM, NUM_CLASSES)

    # One-time fold / pad / bf16 cast, hoisted out of the per-call forward path.
    prepared = prepare_params(params)

    out = vit_convformer_forward(x, prepared, patch=PATCH)
    out = jax.block_until_ready(out)

    ref = reference_forward(x, params, patch=PATCH)
    assert out.shape == (B, NUM_CLASSES)
    # bf16 MXU operands (and offline-folded wp@w1) vs. pure-f32 reference -> relaxed tolerance.
    assert jnp.allclose(out, ref, atol=2e-2, rtol=2e-2), "mismatch vs JAX reference"

    print("KERNEL_OK")
</pallas_src>

<mosaic_0001>
module attributes {stable_mosaic.version = 11 : i64} {
  func.func @vit_convformer_kernel(%arg0: i32, %arg1: memref<16x128xbf16, #tpu.memory_space<vmem>>, %arg2: memref<128x512xbf16, #tpu.memory_space<vmem>>, %arg3: memref<1x512xf32, #tpu.memory_space<vmem>>, %arg4: memref<512x256xbf16, #tpu.memory_space<vmem>>, %arg5: memref<1x256xf32, #tpu.memory_space<vmem>>, %arg6: memref<256x128xbf16, #tpu.memory_space<vmem>>, %arg7: memref<1x128xf32, #tpu.memory_space<vmem>>, %arg8: memref<16x128xf32, #tpu.memory_space<vmem>>) attributes {dimension_semantics = [#tpu.dimension_semantics<parallel>], iteration_bounds = array<i64: 1>, scalar_prefetch = 0 : i64, scratch_operands = 0 : i64, tpu.core_type = #tpu.core_type<tc>, window_params = [{transform_indices = @transform_0, window_bounds = array<i64: 16, 128>}, {pipeline_mode = #tpu.pipeline_mode<synchronous>, transform_indices = @transform_1, window_bounds = array<i64: 128, 512>}, {pipeline_mode = #tpu.pipeline_mode<synchronous>, transform_indices = @transform_2, window_bounds = array<i64: 1, 512>}, {pipeline_mode = #tpu.pipeline_mode<synchronous>, transform_indices = @transform_3, window_bounds = array<i64: 512, 256>}, {pipeline_mode = #tpu.pipeline_mode<synchronous>, transform_indices = @transform_4, window_bounds = array<i64: 1, 256>}, {pipeline_mode = #tpu.pipeline_mode<synchronous>, transform_indices = @transform_5, window_bounds = array<i64: 256, 128>}, {pipeline_mode = #tpu.pipeline_mode<synchronous>, transform_indices = @transform_6, window_bounds = array<i64: 1, 128>}, {transform_indices = @transform_7, window_bounds = array<i64: 16, 128>}]} {
    %c0 = arith.constant 0 : index
    %c0_0 = arith.constant 0 : index
    %0 = vector.load %arg1[%c0, %c0_0] : memref<16x128xbf16, #tpu.memory_space<vmem>>, vector<16x128xbf16>
    %c0_1 = arith.constant 0 : index
    %c0_2 = arith.constant 0 : index
    %1 = vector.load %arg2[%c0_1, %c0_2] : memref<128x512xbf16, #tpu.memory_space<vmem>>, vector<128x512xbf16>
    %cst = arith.constant dense<0.000000e+00> : vector<16x512xf32>
    %2 = tpu.matmul %0, %1, %cst {dimension_numbers = #tpu.dot_dimension_numbers<[1], [0], [0], [1], [0, 0, 1, 1], [], []>} : vector<16x128xbf16>, vector<128x512xbf16>, vector<16x512xf32> -> vector<16x512xf32>
    %c0_3 = arith.constant 0 : index
    %c0_4 = arith.constant 0 : index
    %3 = vector.load %arg3[%c0_3, %c0_4] : memref<1x512xf32, #tpu.memory_space<vmem>>, vector<1x512xf32>
    %4 = vector.broadcast %3 : vector<1x512xf32> to vector<16x512xf32>
    %5 = arith.addf %2, %4 : vector<16x512xf32>
    %cst_5 = arith.constant 0.000000e+00 : f32
    %6 = vector.broadcast %cst_5 : f32 to vector<16x512xf32>
    %7 = arith.maximumf %5, %6 : vector<16x512xf32>
    %8 = arith.truncf %7 : vector<16x512xf32> to vector<16x512xbf16>
    %c0_6 = arith.constant 0 : index
    %c0_7 = arith.constant 0 : index
    %9 = vector.load %arg4[%c0_6, %c0_7] : memref<512x256xbf16, #tpu.memory_space<vmem>>, vector<512x256xbf16>
    %cst_8 = arith.constant dense<0.000000e+00> : vector<16x256xf32>
    %10 = tpu.matmul %8, %9, %cst_8 {dimension_numbers = #tpu.dot_dimension_numbers<[1], [0], [0], [1], [0, 0, 1, 1], [], []>} : vector<16x512xbf16>, vector<512x256xbf16>, vector<16x256xf32> -> vector<16x256xf32>
    %c0_9 = arith.constant 0 : index
    %c0_10 = arith.constant 0 : index
    %11 = vector.load %arg5[%c0_9, %c0_10] : memref<1x256xf32, #tpu.memory_space<vmem>>, vector<1x256xf32>
    %12 = vector.broadcast %11 : vector<1x256xf32> to vector<16x256xf32>
    %13 = arith.addf %10, %12 : vector<16x256xf32>
    %cst_11 = arith.constant 0.000000e+00 : f32
    %14 = vector.broadcast %cst_11 : f32 to vector<16x256xf32>
    %15 = arith.maximumf %13, %14 : vector<16x256xf32>
    %16 = arith.truncf %15 : vector<16x256xf32> to vector<16x256xbf16>
    %c0_12 = arith.constant 0 : index
    %c0_13 = arith.constant 0 : index
    %17 = vector.load %arg6[%c0_12, %c0_13] : memref<256x128xbf16, #tpu.memory_space<vmem>>, vector<256x128xbf16>
    %cst_14 = arith.constant dense<0.000000e+00> : vector<16x128xf32>
    %18 = tpu.matmul %16, %17, %cst_14 {dimension_numbers = #tpu.dot_dimension_numbers<[1], [0], [0], [1], [0, 0, 1, 1], [], []>} : vector<16x256xbf16>, vector<256x128xbf16>, vector<16x128xf32> -> vector<16x128xf32>
    %c0_15 = arith.constant 0 : index
    %c0_16 = arith.constant 0 : index
    %19 = vector.load %arg7[%c0_15, %c0_16] : memref<1x128xf32, #tpu.memory_space<vmem>>, vector<1x128xf32>
    %20 = vector.broadcast %19 : vector<1x128xf32> to vector<16x128xf32>
    %21 = arith.addf %18, %20 : vector<16x128xf32>
    %c0_17 = arith.constant 0 : index
    %c0_18 = arith.constant 0 : index
    %22 = vector.load %arg8[%c0_17, %c0_18] : memref<16x128xf32, #tpu.memory_space<vmem>>, vector<16x128xf32>
    tpu.vector_store %arg8[%c0_17, %c0_18], %21 {strides = array<i32>} : memref<16x128xf32, #tpu.memory_space<vmem>>, vector<16x128xf32>,
    return
  }
  func.func @transform_0(%arg0: i32) -> (i32, i32) {
    %c0_i32 = arith.constant 0 : i32
    %c0_i32_0 = arith.constant 0 : i32
    return %arg0, %c0_i32 : i32, i32
  }
  func.func @transform_1(%arg0: i32) -> (i32, i32) {
    %c0_i32 = arith.constant 0 : i32
    %c0_i32_0 = arith.constant 0 : i32
    %c0_i32_1 = arith.constant 0 : i32
    return %c0_i32, %c0_i32_0 : i32, i32
  }
  func.func @transform_2(%arg0: i32) -> (i32, i32) {
    %c0_i32 = arith.constant 0 : i32
    %c0_i32_0 = arith.constant 0 : i32
    %c0_i32_1 = arith.constant 0 : i32
    return %c0_i32, %c0_i32_0 : i32, i32
  }
  func.func @transform_3(%arg0: i32) -> (i32, i32) {
    %c0_i32 = arith.constant 0 : i32
    %c0_i32_0 = arith.constant 0 : i32
    %c0_i32_1 = arith.constant 0 : i32
    return %c0_i32, %c0_i32_0 : i32, i32
  }
  func.func @transform_4(%arg0: i32) -> (i32, i32) {
    %c0_i32 = arith.constant 0 : i32
    %c0_i32_0 = arith.constant 0 : i32
    %c0_i32_1 = arith.constant 0 : i32
    return %c0_i32, %c0_i32_0 : i32, i32
  }
  func.func @transform_5(%arg0: i32) -> (i32, i32) {
    %c0_i32 = arith.constant 0 : i32
    %c0_i32_0 = arith.constant 0 : i32
    %c0_i32_1 = arith.constant 0 : i32
    return %c0_i32, %c0_i32_0 : i32, i32
  }
  func.func @transform_6(%arg0: i32) -> (i32, i32) {
    %c0_i32 = arith.constant 0 : i32
    %c0_i32_0 = arith.constant 0 : i32
    %c0_i32_1 = arith.constant 0 : i32
    return %c0_i32, %c0_i32_0 : i32, i32
  }
  func.func @transform_7(%arg0: i32) -> (i32, i32) {
    %c0_i32 = arith.constant 0 : i32
    %c0_i32_0 = arith.constant 0 : i32
    return %arg0, %c0_i32 : i32, i32
  }
}

</mosaic_0001>

<llo_original>
// kernel: tpu_custom_call.1
$region0: #{tpu_custom_call.1}
  #allocation0 [shape = 'u32[]', space=smem, size = 0x4, offset = 0x4, fixed_abs, tag = 'smem constant byte address 0x4 - core index']
  #allocation1 [shape = 'u32[72,128]{1,0:T(1,128)}', space=vmem, size = 0x9000, scoped, tag = 'internal scratch']
  %s0 = inlined_call_operand.hbm [shape: bf16[16,128], index: 0, kind: input, shape index: {}]
  %s1 = inlined_call_operand.hbm [shape: bf16[128,512], index: 1, kind: input, shape index: {}]
  %s2 = inlined_call_operand.hbm [shape: f32[1,512], index: 2, kind: input, shape index: {}]
  %s3 = inlined_call_operand.hbm [shape: bf16[512,256], index: 3, kind: input, shape index: {}]
  %s4 = inlined_call_operand.vmem [shape: f32[1,256], index: 4, kind: input, shape index: {}]
  %s5 = inlined_call_operand.hbm [shape: bf16[256,128], index: 5, kind: input, shape index: {}]
  %s6 = inlined_call_operand.vmem [shape: f32[1,128], index: 6, kind: input, shape index: {}]
  %s7 = inlined_call_operand.hbm [shape: f32[16,128], index: 7, kind: output, shape index: {}]
  %s8 = sld [smem:[#allocation0]]
  $region58: #{tpu_custom_call.1} parent=0
    _
  %s10 = ssub.s32 1, %s8
  %s11 = scalar_select 0, %s10, %s8
  $region1: #{tpu_custom_call.1} parent=0
    #allocation2 [shape = 'u8[4096]{0}', space=vmem, size = 0x1000, scoped, tag = 'input window, operand 0, single buffered']
    #allocation3 [shape = 's32[1]{0}', space=sflag, size = 0x4, scoped, tag = 'scoped memory for tpu_custom_call.1']
    #allocation4 [shape = 's32[1]{0}', space=sflag, size = 0x4, scoped, tag = 'scoped memory for tpu_custom_call.1']
    #allocation5 [shape = 'u8[131072]{0}', space=vmem, size = 0x20000, scoped, tag = 'input window, operand 1, single buffered']
    #allocation6 [shape = 's32[1]{0}', space=sflag, size = 0x4, scoped, tag = 'scoped memory for tpu_custom_call.1']
    #allocation7 [shape = 'u8[2048]{0}', space=vmem, size = 0x800, scoped, tag = 'input window, operand 2, single buffered']
    #allocation8 [shape = 'u8[262144]{0}', space=vmem, size = 0x40000, scoped, tag = 'input window, operand 3, single buffered']
    #allocation9 [shape = 's32[1]{0}', space=sflag, size = 0x4, scoped, tag = 'scoped memory for tpu_custom_call.1']
    #allocation10 [shape = 'u8[65536]{0}', space=vmem, size = 0x10000, scoped, tag = 'input window, operand 5, single buffered']
    #allocation11 [shape = 'u8[8192]{0}', space=vmem, size = 0x2000, scoped, tag = 'output window, operand 0, single buffered']
    %12 = vsyncpa [#allocation3], 0
    %13 = vsyncpa [#allocation6], 0
    %14 = vsyncpa [#allocation9], 0
    %15 = vsyncpa [#allocation4], 0
    // Predicated region
    $region2: #{tpu_custom_call.1} parent=1 // pred_check
      _
    $region3: #{tpu_custom_call.1} parent=1 // pred_check_branch
      %17 = sbr.rel (0) target = $region5
    $region4: #{tpu_custom_call.1} parent=1 // pred_region
      %19 = vsyncadd [#allocation3], 0
      %s20 = sshll.u32 %s0, 4
      %s21 = int_to_ptr.hbm [resolvable:$true] %s20
      %s22 = sshll.u32 [#allocation2], 4
      %s23 = int_to_ptr.vmem [resolvable:$true] %s22
      %28 = dma.hbm_to_vmem [thread:$0]  %s21, 128, %s23, [#allocation3], 64, 64, 4
    $region5: #{tpu_custom_call.1} parent=1 // pred_fallthru
      _
    // Predicated region
    $region6: #{tpu_custom_call.1} parent=1 // pred_check
      _
    $region7: #{tpu_custom_call.1} parent=1 // pred_check_branch
      %30 = sbr.rel (0) target = $region9
    $region8: #{tpu_custom_call.1} parent=1 // pred_region
      %32 = vsyncadd [#allocation6], 0
      %s33 = sshll.u32 %s1, 4
      %s34 = int_to_ptr.hbm [resolvable:$true] %s33
      %s35 = sshll.u32 [#allocation5], 4
      %s36 = int_to_ptr.vmem [resolvable:$true] %s35
      %41 = dma.hbm_to_vmem [thread:$0]  %s34, 4096, %s36, [#allocation6], 256, 256, 16
    $region9: #{tpu_custom_call.1} parent=1 // pred_fallthru
      _
    // Predicated region
    $region10: #{tpu_custom_call.1} parent=1 // pred_check
      _
    $region11: #{tpu_custom_call.1} parent=1 // pred_check_branch
      %43 = sbr.rel (0) target = $region13
    $region12: #{tpu_custom_call.1} parent=1 // pred_region
      %45 = vsyncadd [#allocation6], 0
      %s47 = sshll.u32 %s2, 4
      %s48 = int_to_ptr.hbm [resolvable:$true] %s47
      %s49 = sshll.u32 [#allocation7], 4
      %s50 = int_to_ptr.vmem [resolvable:$true] %s49
      %52 = dma.hbm_to_vmem [thread:$0]  %s48, 64, %s50, [#allocation6]
    $region13: #{tpu_custom_call.1} parent=1 // pred_fallthru
      _
    // Predicated region
    $region14: #{tpu_custom_call.1} parent=1 // pred_check
      _
    $region15: #{tpu_custom_call.1} parent=1 // pred_check_branch
      %54 = sbr.rel (0) target = $region17
    $region16: #{tpu_custom_call.1} parent=1 // pred_region
      %56 = vsyncadd [#allocation9], 0
      %s57 = sshll.u32 %s3, 4
      %s58 = int_to_ptr.hbm [resolvable:$true] %s57
      %s59 = sshll.u32 [#allocation8], 4
      %s60 = int_to_ptr.vmem [resolvable:$true] %s59
      %65 = dma.hbm_to_vmem [thread:$0]  %s58, 8192, %s60, [#allocation9], 128, 128, 8
    $region17: #{tpu_custom_call.1} parent=1 // pred_fallthru
      _
    // Predicated region
    $region18: #{tpu_custom_call.1} parent=1 // pred_check
      _
    $region19: #{tpu_custom_call.1} parent=1 // pred_check_branch
      %67 = sbr.rel (0) target = $region21
    $region20: #{tpu_custom_call.1} parent=1 // pred_region
      _
    $region21: #{tpu_custom_call.1} parent=1 // pred_fallthru
      _
    // Predicated region
    $region22: #{tpu_custom_call.1} parent=1 // pred_check
      _
    $region23: #{tpu_custom_call.1} parent=1 // pred_check_branch
      %69 = sbr.rel (0) target = $region25
    $region24: #{tpu_custom_call.1} parent=1 // pred_region
      %71 = vsyncadd [#allocation9], 0
      %s72 = sshll.u32 %s5, 4
      %s73 = int_to_ptr.hbm [resolvable:$true] %s72
      %s74 = sshll.u32 [#allocation10], 4
      %s75 = int_to_ptr.vmem [resolvable:$true] %s74
      %80 = dma.hbm_to_vmem [thread:$0]  %s73, 2048, %s75, [#allocation9], 64, 64, 4
    $region25: #{tpu_custom_call.1} parent=1 // pred_fallthru
      _
    // Predicated region
    $region26: #{tpu_custom_call.1} parent=1 // pred_check
      _
    $region27: #{tpu_custom_call.1} parent=1 // pred_check_branch
      %82 = sbr.rel (0) target = $region29
    $region28: #{tpu_custom_call.1} parent=1 // pred_region
      _
    $region29: #{tpu_custom_call.1} parent=1 // pred_fallthru
      _
    // Predicated region
    $region30: #{tpu_custom_call.1} parent=1 // pred_check
      _
    $region31: #{tpu_custom_call.1} parent=1 // pred_check_branch
      %84 = sbr.rel (0) target = $region33
    $region32: #{tpu_custom_call.1} parent=1 // pred_region
      %86 = dma.done [#allocation3], 128
    $region33: #{tpu_custom_call.1} parent=1 // pred_fallthru
      _
    // Predicated region
    $region34: #{tpu_custom_call.1} parent=1 // pred_check
      _
    $region35: #{tpu_custom_call.1} parent=1 // pred_check_branch
      %88 = sbr.rel (0) target = $region37
    $region36: #{tpu_custom_call.1} parent=1 // pred_region
      %90 = dma.done [#allocation6], 4096
    $region37: #{tpu_custom_call.1} parent=1 // pred_fallthru
      _
    // Predicated region
    $region38: #{tpu_custom_call.1} parent=1 // pred_check
      _
    $region39: #{tpu_custom_call.1} parent=1 // pred_check_branch
      %92 = sbr.rel (0) target = $region41
    $region40: #{tpu_custom_call.1} parent=1 // pred_region
      %94 = dma.done [#allocation6], 64
    $region41: #{tpu_custom_call.1} parent=1 // pred_fallthru
      _
    // Predicated region
    $region42: #{tpu_custom_call.1} parent=1 // pred_check
      _
    $region43: #{tpu_custom_call.1} parent=1 // pred_check_branch
      %96 = sbr.rel (0) target = $region45
    $region44: #{tpu_custom_call.1} parent=1 // pred_region
      %98 = dma.done [#allocation9], 8192
    $region45: #{tpu_custom_call.1} parent=1 // pred_fallthru
      _
    // Predicated region
    $region46: #{tpu_custom_call.1} parent=1 // pred_check
      _
    $region47: #{tpu_custom_call.1} parent=1 // pred_check_branch
      %100 = sbr.rel (0) target = $region49
    $region48: #{tpu_custom_call.1} parent=1 // pred_region
      %102 = dma.done [#allocation9], 2048
    $region49: #{tpu_custom_call.1} parent=1 // pred_fallthru
      _
    %v103 = vld [vmem:[#allocation2] sm:$0xf]
    %v104 = vld [vmem:[#allocation2 + $0x4] sm:$0xf]
    %v105 = vld [vmem:[#allocation5] sm:$0xff]
    %v106 = vld [vmem:[#allocation5 + $0x8] sm:$0xff]
    %v107 = vld [vmem:[#allocation5 + $0x10] sm:$0xff]
    %v108 = vld [vmem:[#allocation5 + $0x18] sm:$0xff]
    %v109 = vld [vmem:[#allocation5 + $0x20] sm:$0xff]
    %v110 = vld [vmem:[#allocation5 + $0x28] sm:$0xff]
    %v111 = vld [vmem:[#allocation5 + $0x30] sm:$0xff]
    %v112 = vld [vmem:[#allocation5 + $0x38] sm:$0xff]
    %v113 = vld [vmem:[#allocation5 + $0x40] sm:$0xff]
    %v114 = vld [vmem:[#allocation5 + $0x48] sm:$0xff]
    %v115 = vld [vmem:[#allocation5 + $0x50] sm:$0xff]
    %v116 = vld [vmem:[#allocation5 + $0x58] sm:$0xff]
    %v117 = vld [vmem:[#allocation5 + $0x60] sm:$0xff]
    %v118 = vld [vmem:[#allocation5 + $0x68] sm:$0xff]
    %v119 = vld [vmem:[#allocation5 + $0x70] sm:$0xff]
    %v120 = vld [vmem:[#allocation5 + $0x78] sm:$0xff]
    %v121 = vld [vmem:[#allocation5 + $0x80] sm:$0xff]
    %v122 = vld [vmem:[#allocation5 + $0x88] sm:$0xff]
    %v123 = vld [vmem:[#allocation5 + $0x90] sm:$0xff]
    %v124 = vld [vmem:[#allocation5 + $0x98] sm:$0xff]
    %v125 = vld [vmem:[#allocation5 + $0xa0] sm:$0xff]
    %v126 = vld [vmem:[#allocation5 + $0xa8] sm:$0xff]
    %v127 = vld [vmem:[#allocation5 + $0xb0] sm:$0xff]
    %v128 = vld [vmem:[#allocation5 + $0xb8] sm:$0xff]
    %v129 = vld [vmem:[#allocation5 + $0xc0] sm:$0xff]
    %v130 = vld [vmem:[#allocation5 + $0xc8] sm:$0xff]
    %v131 = vld [vmem:[#allocation5 + $0xd0] sm:$0xff]
    %v132 = vld [vmem:[#allocation5 + $0xd8] sm:$0xff]
    %v133 = vld [vmem:[#allocation5 + $0xe0] sm:$0xff]
    %v134 = vld [vmem:[#allocation5 + $0xe8] sm:$0xff]
    %v135 = vld [vmem:[#allocation5 + $0xf0] sm:$0xff]
    %v136 = vld [vmem:[#allocation5 + $0xf8] sm:$0xff]
    %v137 = vld [vmem:[#allocation7] sm:$0xf]
    %v139 = vperm.slane %v137, 0
    %v140 = vperm.slane %v137, 1
    %v141 = vperm.slane %v137, 2
    %v142 = vperm.slane %v137, 3
    %v149 = vunpack.c.l.b16 %v103
    %v150 = vunpack.c.l.b16 %v104
    %v151 = vpack.c.b16 %v150, %v149
    %v185 = vunpack.c.l.b16 %v105
    %v186 = vunpack.c.h.b16 %v105
    %v187 = vunpack.c.l.b16 %v106
    %v188 = vunpack.c.h.b16 %v106
    %v189 = vunpack.c.l.b16 %v107
    %v190 = vunpack.c.h.b16 %v107
    %v191 = vunpack.c.l.b16 %v108
    %v192 = vunpack.c.h.b16 %v108
    %v193 = vunpack.c.l.b16 %v109
    %v194 = vunpack.c.h.b16 %v109
    %v195 = vunpack.c.l.b16 %v110
    %v196 = vunpack.c.h.b16 %v110
    %v197 = vunpack.c.l.b16 %v111
    %v198 = vunpack.c.h.b16 %v111
    %v199 = vunpack.c.l.b16 %v112
    %v200 = vunpack.c.h.b16 %v112
    %v201 = vunpack.c.l.b16 %v113
    %v202 = vunpack.c.h.b16 %v113
    %v203 = vunpack.c.l.b16 %v114
    %v204 = vunpack.c.h.b16 %v114
    %v205 = vunpack.c.l.b16 %v115
    %v206 = vunpack.c.h.b16 %v115
    %v207 = vunpack.c.l.b16 %v116
    %v208 = vunpack.c.h.b16 %v116
    %v209 = vunpack.c.l.b16 %v117
    %v210 = vunpack.c.h.b16 %v117
    %v211 = vunpack.c.l.b16 %v118
    %v212 = vunpack.c.h.b16 %v118
    %v213 = vunpack.c.l.b16 %v119
    %v214 = vunpack.c.h.b16 %v119
    %v215 = vunpack.c.l.b16 %v120
    %v216 = vunpack.c.h.b16 %v120
    %v217 = vunpack.c.l.b16 %v121
    %v218 = vunpack.c.h.b16 %v121
    %v219 = vunpack.c.l.b16 %v122
    %v220 = vunpack.c.h.b16 %v122
    %v221 = vunpack.c.l.b16 %v123
    %v222 = vunpack.c.h.b16 %v123
    %v223 = vunpack.c.l.b16 %v124
    %v224 = vunpack.c.h.b16 %v124
    %v225 = vunpack.c.l.b16 %v125
    %v226 = vunpack.c.h.b16 %v125
    %v227 = vunpack.c.l.b16 %v126
    %v228 = vunpack.c.h.b16 %v126
    %v229 = vunpack.c.l.b16 %v127
    %v230 = vunpack.c.h.b16 %v127
    %v231 = vunpack.c.l.b16 %v128
    %v232 = vunpack.c.h.b16 %v128
    %v233 = vunpack.c.l.b16 %v129
    %v234 = vunpack.c.h.b16 %v129
    %v235 = vunpack.c.l.b16 %v130
    %v236 = vunpack.c.h.b16 %v130
    %v237 = vunpack.c.l.b16 %v131
    %v238 = vunpack.c.h.b16 %v131
    %v239 = vunpack.c.l.b16 %v132
    %v240 = vunpack.c.h.b16 %v132
    %v241 = vunpack.c.l.b16 %v133
    %v242 = vunpack.c.h.b16 %v133
    %v243 = vunpack.c.l.b16 %v134
    %v244 = vunpack.c.h.b16 %v134
    %v245 = vunpack.c.l.b16 %v135
    %v246 = vunpack.c.h.b16 %v135
    %v247 = vunpack.c.l.b16 %v136
    %v248 = vunpack.c.h.b16 %v136
    %v249 = vpack.c.b16 %v189, %v185
    %v250 = vpack.c.b16 %v190, %v186
    %v251 = vpack.c.b16 %v191, %v187
    %v252 = vpack.c.b16 %v192, %v188
    %v253 = vpack.c.b16 %v197, %v193
    %v254 = vpack.c.b16 %v198, %v194
    %v255 = vpack.c.b16 %v199, %v195
    %v256 = vpack.c.b16 %v200, %v196
    %v257 = vpack.c.b16 %v205, %v201
    %v258 = vpack.c.b16 %v206, %v202
    %v259 = vpack.c.b16 %v207, %v203
    %v260 = vpack.c.b16 %v208, %v204
    %v261 = vpack.c.b16 %v213, %v209
    %v262 = vpack.c.b16 %v214, %v210
    %v263 = vpack.c.b16 %v215, %v211
    %v264 = vpack.c.b16 %v216, %v212
    %v265 = vpack.c.b16 %v221, %v217
    %v266 = vpack.c.b16 %v222, %v218
    %v267 = vpack.c.b16 %v223, %v219
    %v268 = vpack.c.b16 %v224, %v220
    %v269 = vpack.c.b16 %v229, %v225
    %v270 = vpack.c.b16 %v230, %v226
    %v271 = vpack.c.b16 %v231, %v227
    %v272 = vpack.c.b16 %v232, %v228
    %v273 = vpack.c.b16 %v237, %v233
    %v274 = vpack.c.b16 %v238, %v234
    %v275 = vpack.c.b16 %v239, %v235
    %v276 = vpack.c.b16 %v240, %v236
    %v277 = vpack.c.b16 %v245, %v241
    %v278 = vpack.c.b16 %v246, %v242
    %v279 = vpack.c.b16 %v247, %v243
    %v280 = vpack.c.b16 %v248, %v244
    %313 = vmatpush.bf16.msra.mxu0 %v277
    %314 = vmatpush.bf16.msra.mxu0 %v273
    %315 = vmatpush.bf16.msra.mxu0 %v269
    %316 = vmatpush.bf16.msra.mxu0 %v265
    %317 = vmatpush.bf16.msra.mxu0 %v261
    %318 = vmatpush.bf16.msra.mxu0 %v257
    %319 = vmatpush.bf16.msra.mxu0 %v253
    %320 = vmatpush.bf16.msra.mxu0 %v249
    %321 = vmatmul.bf16.gmra.mxu0 %v151
    %v322 = vpop.f32.mrf.mxu0
    %v323 = vadd.f32 %v139, %v322
    %v324 = vpop.f32.mrf.mxu0
    %v325 = vadd.f32 %v139, %v324
    %326 = vdwg.mxu0
    %327 = vmatpush.bf16.msra.mxu0 %v278
    %328 = vmatpush.bf16.msra.mxu0 %v274
    %329 = vmatpush.bf16.msra.mxu0 %v270
    %330 = vmatpush.bf16.msra.mxu0 %v266
    %331 = vmatpush.bf16.msra.mxu0 %v262
    %332 = vmatpush.bf16.msra.mxu0 %v258
    %333 = vmatpush.bf16.msra.mxu0 %v254
    %334 = vmatpush.bf16.msra.mxu0 %v250
    %335 = vmatmul.bf16.gmra.mxu0 %v151
    %v336 = vpop.f32.mrf.mxu0
    %v337 = vadd.f32 %v140, %v336
    %v338 = vpop.f32.mrf.mxu0
    %v339 = vadd.f32 %v140, %v338
    %340 = vdwg.mxu0
    %341 = vmatpush.bf16.msra.mxu0 %v279
    %342 = vmatpush.bf16.msra.mxu0 %v275
    %343 = vmatpush.bf16.msra.mxu0 %v271
    %344 = vmatpush.bf16.msra.mxu0 %v267
    %345 = vmatpush.bf16.msra.mxu0 %v263
    %346 = vmatpush.bf16.msra.mxu0 %v259
    %347 = vmatpush.bf16.msra.mxu0 %v255
    %348 = vmatpush.bf16.msra.mxu0 %v251
    %349 = vmatmul.bf16.gmra.mxu0 %v151
    %v350 = vpop.f32.mrf.mxu0
    %v351 = vadd.f32 %v141, %v350
    %v352 = vpop.f32.mrf.mxu0
    %v353 = vadd.f32 %v141, %v352
    %354 = vdwg.mxu0
    %355 = vmatpush.bf16.msra.mxu0 %v280
    %356 = vmatpush.bf16.msra.mxu0 %v276
    %357 = vmatpush.bf16.msra.mxu0 %v272
    %358 = vmatpush.bf16.msra.mxu0 %v268
    %359 = vmatpush.bf16.msra.mxu0 %v264
    %360 = vmatpush.bf16.msra.mxu0 %v260
    %361 = vmatpush.bf16.msra.mxu0 %v256
    %362 = vmatpush.bf16.msra.mxu0 %v252
    %363 = vmatmul.bf16.gmra.mxu0 %v151
    %v364 = vpop.f32.mrf.mxu0
    %v365 = vadd.f32 %v142, %v364
    %v366 = vpop.f32.mrf.mxu0
    %v367 = vadd.f32 %v142, %v366
    %368 = vdwg.mxu0
    %v369 = vmax.f32 %v323, 0.0
    %v370 = vmax.f32 %v337, 0.0
    %v371 = vmax.f32 %v351, 0.0
    %v372 = vmax.f32 %v365, 0.0
    %v373 = vmax.f32 %v325, 0.0
    %v374 = vmax.f32 %v339, 0.0
    %v375 = vmax.f32 %v353, 0.0
    %v376 = vmax.f32 %v367, 0.0
    %v377 = vpack.c.bf16 %v373, %v369
    %v378 = vpack.c.bf16 %v374, %v370
    %v379 = vpack.c.bf16 %v375, %v371
    %v380 = vpack.c.bf16 %v376, %v372
    %v381 = vld [vmem:[#allocation8] sm:$0xff]
    %v382 = vld [vmem:[#allocation8 + $0x8] sm:$0xff]
    %v383 = vld [vmem:[#allocation8 + $0x10] sm:$0xff]
    %v384 = vld [vmem:[#allocation8 + $0x18] sm:$0xff]
    %v385 = vld [vmem:[#allocation8 + $0x20] sm:$0xff]
    %v386 = vld [vmem:[#allocation8 + $0x28] sm:$0xff]
    %v387 = vld [vmem:[#allocation8 + $0x30] sm:$0xff]
    %v388 = vld [vmem:[#allocation8 + $0x38] sm:$0xff]
    %v389 = vld [vmem:[#allocation8 + $0x40] sm:$0xff]
    %v390 = vld [vmem:[#allocation8 + $0x48] sm:$0xff]
    %v391 = vld [vmem:[#allocation8 + $0x50] sm:$0xff]
    %v392 = vld [vmem:[#allocation8 + $0x58] sm:$0xff]
    %v393 = vld [vmem:[#allocation8 + $0x60] sm:$0xff]
    %v394 = vld [vmem:[#allocation8 + $0x68] sm:$0xff]
    %v395 = vld [vmem:[#allocation8 + $0x70] sm:$0xff]
    %v396 = vld [vmem:[#allocation8 + $0x78] sm:$0xff]
    %v397 = vld [vmem:[#allocation8 + $0x80] sm:$0xff]
    %v398 = vld [vmem:[#allocation8 + $0x88] sm:$0xff]
    %v399 = vld [vmem:[#allocation8 + $0x90] sm:$0xff]
    %v400 = vld [vmem:[#allocation8 + $0x98] sm:$0xff]
    %v401 = vld [vmem:[#allocation8 + $0xa0] sm:$0xff]
    %v402 = vld [vmem:[#allocation8 + $0xa8] sm:$0xff]
    %v403 = vld [vmem:[#allocation8 + $0xb0] sm:$0xff]
    %v404 = vld [vmem:[#allocation8 + $0xb8] sm:$0xff]
    %v405 = vld [vmem:[#allocation8 + $0xc0] sm:$0xff]
    %v406 = vld [vmem:[#allocation8 + $0xc8] sm:$0xff]
    %v407 = vld [vmem:[#allocation8 + $0xd0] sm:$0xff]
    %v408 = vld [vmem:[#allocation8 + $0xd8] sm:$0xff]
    %v409 = vld [vmem:[#allocation8 + $0xe0] sm:$0xff]
    %v410 = vld [vmem:[#allocation8 + $0xe8] sm:$0xff]
    %v411 = vld [vmem:[#allocation8 + $0xf0] sm:$0xff]
    %v412 = vld [vmem:[#allocation8 + $0xf8] sm:$0xff]
    %v413 = vld [vmem:[#allocation8 + $0x100] sm:$0xff]
    %v414 = vld [vmem:[#allocation8 + $0x108] sm:$0xff]
    %v415 = vld [vmem:[#allocation8 + $0x110] sm:$0xff]
    %v416 = vld [vmem:[#allocation8 + $0x118] sm:$0xff]
    %v417 = vld [vmem:[#allocation8 + $0x120] sm:$0xff]
    %v418 = vld [vmem:[#allocation8 + $0x128] sm:$0xff]
    %v419 = vld [vmem:[#allocation8 + $0x130] sm:$0xff]
    %v420 = vld [vmem:[#allocation8 + $0x138] sm:$0xff]
    %v421 = vld [vmem:[#allocation8 + $0x140] sm:$0xff]
    %v422 = vld [vmem:[#allocation8 + $0x148] sm:$0xff]
    %v423 = vld [vmem:[#allocation8 + $0x150] sm:$0xff]
    %v424 = vld [vmem:[#allocation8 + $0x158] sm:$0xff]
    %v425 = vld [vmem:[#allocation8 + $0x160] sm:$0xff]
    %v426 = vld [vmem:[#allocation8 + $0x168] sm:$0xff]
    %v427 = vld [vmem:[#allocation8 + $0x170] sm:$0xff]
    %v428 = vld [vmem:[#allocation8 + $0x178] sm:$0xff]
    %v429 = vld [vmem:[#allocation8 + $0x180] sm:$0xff]
    %v430 = vld [vmem:[#allocation8 + $0x188] sm:$0xff]
    %v431 = vld [vmem:[#allocation8 + $0x190] sm:$0xff]
    %v432 = vld [vmem:[#allocation8 + $0x198] sm:$0xff]
    %v433 = vld [vmem:[#allocation8 + $0x1a0] sm:$0xff]
    %v434 = vld [vmem:[#allocation8 + $0x1a8] sm:$0xff]
    %v435 = vld [vmem:[#allocation8 + $0x1b0] sm:$0xff]
    %v436 = vld [vmem:[#allocation8 + $0x1b8] sm:$0xff]
    %v437 = vld [vmem:[#allocation8 + $0x1c0] sm:$0xff]
    %v438 = vld [vmem:[#allocation8 + $0x1c8] sm:$0xff]
    %v439 = vld [vmem:[#allocation8 + $0x1d0] sm:$0xff]
    %v440 = vld [vmem:[#allocation8 + $0x1d8] sm:$0xff]
    %v441 = vld [vmem:[#allocation8 + $0x1e0] sm:$0xff]
    %v442 = vld [vmem:[#allocation8 + $0x1e8] sm:$0xff]
    %v443 = vld [vmem:[#allocation8 + $0x1f0] sm:$0xff]
    %v444 = vld [vmem:[#allocation8 + $0x1f8] sm:$0xff]
    %v445 = vld [vmem:[%s4] sm:$0x3]
    %v447 = vperm.slane %v445, 0
    %v448 = vperm.slane %v445, 1
    %v515 = vunpack.c.l.b16 %v381
    %v516 = vunpack.c.h.b16 %v381
    %v517 = vunpack.c.l.b16 %v382
    %v518 = vunpack.c.h.b16 %v382
    %v519 = vunpack.c.l.b16 %v383
    %v520 = vunpack.c.h.b16 %v383
    %v521 = vunpack.c.l.b16 %v384
    %v522 = vunpack.c.h.b16 %v384
    %v523 = vunpack.c.l.b16 %v385
    %v524 = vunpack.c.h.b16 %v385
    %v525 = vunpack.c.l.b16 %v386
    %v526 = vunpack.c.h.b16 %v386
    %v527 = vunpack.c.l.b16 %v387
    %v528 = vunpack.c.h.b16 %v387
    %v529 = vunpack.c.l.b16 %v388
    %v530 = vunpack.c.h.b16 %v388
    %v531 = vunpack.c.l.b16 %v389
    %v532 = vunpack.c.h.b16 %v389
    %v533 = vunpack.c.l.b16 %v390
    %v534 = vunpack.c.h.b16 %v390
    %v535 = vunpack.c.l.b16 %v391
    %v536 = vunpack.c.h.b16 %v391
    %v537 = vunpack.c.l.b16 %v392
    %v538 = vunpack.c.h.b16 %v392
    %v539 = vunpack.c.l.b16 %v393
    %v540 = vunpack.c.h.b16 %v393
    %v541 = vunpack.c.l.b16 %v394
    %v542 = vunpack.c.h.b16 %v394
    %v543 = vunpack.c.l.b16 %v395
    %v544 = vunpack.c.h.b16 %v395
    %v545 = vunpack.c.l.b16 %v396
    %v546 = vunpack.c.h.b16 %v396
    %v547 = vunpack.c.l.b16 %v397
    %v548 = vunpack.c.h.b16 %v397
    %v549 = vunpack.c.l.b16 %v398
    %v550 = vunpack.c.h.b16 %v398
    %v551 = vunpack.c.l.b16 %v399
    %v552 = vunpack.c.h.b16 %v399
    %v553 = vunpack.c.l.b16 %v400
    %v554 = vunpack.c.h.b16 %v400
    %v555 = vunpack.c.l.b16 %v401
    %v556 = vunpack.c.h.b16 %v401
    %v557 = vunpack.c.l.b16 %v402
    %v558 = vunpack.c.h.b16 %v402
    %v559 = vunpack.c.l.b16 %v403
    %v560 = vunpack.c.h.b16 %v403
    %v561 = vunpack.c.l.b16 %v404
    %v562 = vunpack.c.h.b16 %v404
    %v563 = vunpack.c.l.b16 %v405
    %v564 = vunpack.c.h.b16 %v405
    %v565 = vunpack.c.l.b16 %v406
    %v566 = vunpack.c.h.b16 %v406
    %v567 = vunpack.c.l.b16 %v407
    %v568 = vunpack.c.h.b16 %v407
    %v569 = vunpack.c.l.b16 %v408
    %v570 = vunpack.c.h.b16 %v408
    %v571 = vunpack.c.l.b16 %v409
    %v572 = vunpack.c.h.b16 %v409
    %v573 = vunpack.c.l.b16 %v410
    %v574 = vunpack.c.h.b16 %v410
    %v575 = vunpack.c.l.b16 %v411
    %v576 = vunpack.c.h.b16 %v411
    %v577 = vunpack.c.l.b16 %v412
    %v578 = vunpack.c.h.b16 %v412
    %v579 = vunpack.c.l.b16 %v413
    %v580 = vunpack.c.h.b16 %v413
    %v581 = vunpack.c.l.b16 %v414
    %v582 = vunpack.c.h.b16 %v414
    %v583 = vunpack.c.l.b16 %v415
    %v584 = vunpack.c.h.b16 %v415
    %v585 = vunpack.c.l.b16 %v416
    %v586 = vunpack.c.h.b16 %v416
    %v587 = vunpack.c.l.b16 %v417
    %v588 = vunpack.c.h.b16 %v417
    %v589 = vunpack.c.l.b16 %v418
    %v590 = vunpack.c.h.b16 %v418
    %v591 = vunpack.c.l.b16 %v419
    %v592 = vunpack.c.h.b16 %v419
    %v593 = vunpack.c.l.b16 %v420
    %v594 = vunpack.c.h.b16 %v420
    %v595 = vunpack.c.l.b16 %v421
    %v596 = vunpack.c.h.b16 %v421
    %v597 = vunpack.c.l.b16 %v422
    %v598 = vunpack.c.h.b16 %v422
    %v599 = vunpack.c.l.b16 %v423
    %v600 = vunpack.c.h.b16 %v423
    %v601 = vunpack.c.l.b16 %v424
    %v602 = vunpack.c.h.b16 %v424
    %v603 = vunpack.c.l.b16 %v425
    %v604 = vunpack.c.h.b16 %v425
    %v605 = vunpack.c.l.b16 %v426
    %v606 = vunpack.c.h.b16 %v426
    %v607 = vunpack.c.l.b16 %v427
    %v608 = vunpack.c.h.b16 %v427
    %v609 = vunpack.c.l.b16 %v428
    %v610 = vunpack.c.h.b16 %v428
    %v611 = vunpack.c.l.b16 %v429
    %v612 = vunpack.c.h.b16 %v429
    %v613 = vunpack.c.l.b16 %v430
    %v614 = vunpack.c.h.b16 %v430
    %v615 = vunpack.c.l.b16 %v431
    %v616 = vunpack.c.h.b16 %v431
    %v617 = vunpack.c.l.b16 %v432
    %v618 = vunpack.c.h.b16 %v432
    %v619 = vunpack.c.l.b16 %v433
    %v620 = vunpack.c.h.b16 %v433
    %v621 = vunpack.c.l.b16 %v434
    %v622 = vunpack.c.h.b16 %v434
    %v623 = vunpack.c.l.b16 %v435
    %v624 = vunpack.c.h.b16 %v435
    %v625 = vunpack.c.l.b16 %v436
    %v626 = vunpack.c.h.b16 %v436
    %v627 = vunpack.c.l.b16 %v437
    %v628 = vunpack.c.h.b16 %v437
    %v629 = vunpack.c.l.b16 %v438
    %v630 = vunpack.c.h.b16 %v438
    %v631 = vunpack.c.l.b16 %v439
    %v632 = vunpack.c.h.b16 %v439
    %v633 = vunpack.c.l.b16 %v440
    %v634 = vunpack.c.h.b16 %v440
    %v635 = vunpack.c.l.b16 %v441
    %v636 = vunpack.c.h.b16 %v441
    %v637 = vunpack.c.l.b16 %v442
    %v638 = vunpack.c.h.b16 %v442
    %v639 = vunpack.c.l.b16 %v443
    %v640 = vunpack.c.h.b16 %v443
    %v641 = vunpack.c.l.b16 %v444
    %v642 = vunpack.c.h.b16 %v444
    %v643 = vpack.c.b16 %v517, %v515
    %v644 = vpack.c.b16 %v518, %v516
    %v645 = vpack.c.b16 %v521, %v519
    %v646 = vpack.c.b16 %v522, %v520
    %v647 = vpack.c.b16 %v525, %v523
    %v648 = vpack.c.b16 %v526, %v524
    %v649 = vpack.c.b16 %v529, %v527
    %v650 = vpack.c.b16 %v530, %v528
    %v651 = vpack.c.b16 %v533, %v531
    %v652 = vpack.c.b16 %v534, %v532
    %v653 = vpack.c.b16 %v537, %v535
    %v654 = vpack.c.b16 %v538, %v536
    %v655 = vpack.c.b16 %v541, %v539
    %v656 = vpack.c.b16 %v542, %v540
    %v657 = vpack.c.b16 %v545, %v543
    %v658 = vpack.c.b16 %v546, %v544
    %v659 = vpack.c.b16 %v549, %v547
    %v660 = vpack.c.b16 %v550, %v548
    %v661 = vpack.c.b16 %v553, %v551
    %v662 = vpack.c.b16 %v554, %v552
    %v663 = vpack.c.b16 %v557, %v555
    %v664 = vpack.c.b16 %v558, %v556
    %v665 = vpack.c.b16 %v561, %v559
    %v666 = vpack.c.b16 %v562, %v560
    %v667 = vpack.c.b16 %v565, %v563
    %v668 = vpack.c.b16 %v566, %v564
    %v669 = vpack.c.b16 %v569, %v567
    %v670 = vpack.c.b16 %v570, %v568
    %v671 = vpack.c.b16 %v573, %v571
    %v672 = vpack.c.b16 %v574, %v572
    %v673 = vpack.c.b16 %v577, %v575
    %v674 = vpack.c.b16 %v578, %v576
    %v675 = vpack.c.b16 %v581, %v579
    %v676 = vpack.c.b16 %v582, %v580
    %v677 = vpack.c.b16 %v585, %v583
    %v678 = vpack.c.b16 %v586, %v584
    %v679 = vpack.c.b16 %v589, %v587
    %v680 = vpack.c.b16 %v590, %v588
    %v681 = vpack.c.b16 %v593, %v591
    %v682 = vpack.c.b16 %v594, %v592
    %v683 = vpack.c.b16 %v597, %v595
    %v684 = vpack.c.b16 %v598, %v596
    %v685 = vpack.c.b16 %v601, %v599
    %v686 = vpack.c.b16 %v602, %v600
    %v687 = vpack.c.b16 %v605, %v603
    %v688 = vpack.c.b16 %v606, %v604
    %v689 = vpack.c.b16 %v609, %v607
    %v690 = vpack.c.b16 %v610, %v608
    %v691 = vpack.c.b16 %v613, %v611
    %v692 = vpack.c.b16 %v614, %v612
    %v693 = vpack.c.b16 %v617, %v615
    %v694 = vpack.c.b16 %v618, %v616
    %v695 = vpack.c.b16 %v621, %v619
    %v696 = vpack.c.b16 %v622, %v620
    %v697 = vpack.c.b16 %v625, %v623
    %v698 = vpack.c.b16 %v626, %v624
    %v699 = vpack.c.b16 %v629, %v627
    %v700 = vpack.c.b16 %v630, %v628
    %v701 = vpack.c.b16 %v633, %v631
    %v702 = vpack.c.b16 %v634, %v632
    %v703 = vpack.c.b16 %v637, %v635
    %v704 = vpack.c.b16 %v638, %v636
    %v705 = vpack.c.b16 %v641, %v639
    %v706 = vpack.c.b16 %v642, %v640
    %771 = vmatpush.bf16.msra.mxu0 %v657
    %772 = vmatpush.bf16.msra.mxu0 %v655
    %773 = vmatpush.bf16.msra.mxu0 %v653
    %774 = vmatpush.bf16.msra.mxu0 %v651
    %775 = vmatpush.bf16.msra.mxu0 %v649
    %776 = vmatpush.bf16.msra.mxu0 %v647
    %777 = vmatpush.bf16.msra.mxu0 %v645
    %778 = vmatpush.bf16.msra.mxu0 %v643
    %779 = vmatmul.bf16.gmra.mxu0 %v377
    %v780 = vpop.f32.mrf.mxu0
    %v781 = vadd.f32 %v447, %v780
    %v782 = vpop.f32.mrf.mxu0
    %v783 = vadd.f32 %v447, %v782
    %784 = vdwg.mxu0
    %785 = vmatpush.bf16.msra.mxu0 %v673
    %786 = vmatpush.bf16.msra.mxu0 %v671
    %787 = vmatpush.bf16.msra.mxu0 %v669
    %788 = vmatpush.bf16.msra.mxu0 %v667
    %789 = vmatpush.bf16.msra.mxu0 %v665
    %790 = vmatpush.bf16.msra.mxu0 %v663
    %791 = vmatpush.bf16.msra.mxu0 %v661
    %792 = vmatpush.bf16.msra.mxu0 %v659
    %793 = vmatmul.bf16.gmra.mxu0 %v378
    %v794 = vpop.f32.mrf.mxu0
    %v795 = vadd.f32 %v781, %v794
    %v796 = vpop.f32.mrf.mxu0
    %v797 = vadd.f32 %v783, %v796
    %798 = vdwg.mxu0
    %799 = vmatpush.bf16.msra.mxu0 %v689
    %800 = vmatpush.bf16.msra.mxu0 %v687
    %801 = vmatpush.bf16.msra.mxu0 %v685
    %802 = vmatpush.bf16.msra.mxu0 %v683
    %803 = vmatpush.bf16.msra.mxu0 %v681
    %804 = vmatpush.bf16.msra.mxu0 %v679
    %805 = vmatpush.bf16.msra.mxu0 %v677
    %806 = vmatpush.bf16.msra.mxu0 %v675
    %807 = vmatmul.bf16.gmra.mxu0 %v379
    %v808 = vpop.f32.mrf.mxu0
    %v809 = vadd.f32 %v795, %v808
    %v810 = vpop.f32.mrf.mxu0
    %v811 = vadd.f32 %v797, %v810
    %812 = vdwg.mxu0
    %813 = vmatpush.bf16.msra.mxu0 %v705
    %814 = vmatpush.bf16.msra.mxu0 %v703
    %815 = vmatpush.bf16.msra.mxu0 %v701
    %816 = vmatpush.bf16.msra.mxu0 %v699
    %817 = vmatpush.bf16.msra.mxu0 %v697
    %818 = vmatpush.bf16.msra.mxu0 %v695
    %819 = vmatpush.bf16.msra.mxu0 %v693
    %820 = vmatpush.bf16.msra.mxu0 %v691
    %821 = vmatmul.bf16.gmra.mxu0 %v380
    %v822 = vpop.f32.mrf.mxu0
    %v823 = vadd.f32 %v809, %v822
    %v824 = vpop.f32.mrf.mxu0
    %v825 = vadd.f32 %v811, %v824
    %826 = vdwg.mxu0
    %827 = vmatpush.bf16.msra.mxu0 %v658
    %828 = vmatpush.bf16.msra.mxu0 %v656
    %829 = vmatpush.bf16.msra.mxu0 %v654
    %830 = vmatpush.bf16.msra.mxu0 %v652
    %831 = vmatpush.bf16.msra.mxu0 %v650
    %832 = vmatpush.bf16.msra.mxu0 %v648
    %833 = vmatpush.bf16.msra.mxu0 %v646
    %834 = vmatpush.bf16.msra.mxu0 %v644
    %835 = vmatmul.bf16.gmra.mxu0 %v377
    %v836 = vpop.f32.mrf.mxu0
    %v837 = vadd.f32 %v448, %v836
    %v838 = vpop.f32.mrf.mxu0
    %v839 = vadd.f32 %v448, %v838
    %840 = vdwg.mxu0
    %841 = vmatpush.bf16.msra.mxu0 %v674
    %842 = vmatpush.bf16.msra.mxu0 %v672
    %843 = vmatpush.bf16.msra.mxu0 %v670
    %844 = vmatpush.bf16.msra.mxu0 %v668
    %845 = vmatpush.bf16.msra.mxu0 %v666
    %846 = vmatpush.bf16.msra.mxu0 %v664
    %847 = vmatpush.bf16.msra.mxu0 %v662
    %848 = vmatpush.bf16.msra.mxu0 %v660
    %849 = vmatmul.bf16.gmra.mxu0 %v378
    %v850 = vpop.f32.mrf.mxu0
    %v851 = vadd.f32 %v837, %v850
    %v852 = vpop.f32.mrf.mxu0
    %v853 = vadd.f32 %v839, %v852
    %854 = vdwg.mxu0
    %855 = vmatpush.bf16.msra.mxu0 %v690
    %856 = vmatpush.bf16.msra.mxu0 %v688
    %857 = vmatpush.bf16.msra.mxu0 %v686
    %858 = vmatpush.bf16.msra.mxu0 %v684
    %859 = vmatpush.bf16.msra.mxu0 %v682
    %860 = vmatpush.bf16.msra.mxu0 %v680
    %861 = vmatpush.bf16.msra.mxu0 %v678
    %862 = vmatpush.bf16.msra.mxu0 %v676
    %863 = vmatmul.bf16.gmra.mxu0 %v379
    %v864 = vpop.f32.mrf.mxu0
    %v865 = vadd.f32 %v851, %v864
    %v866 = vpop.f32.mrf.mxu0
    %v867 = vadd.f32 %v853, %v866
    %868 = vdwg.mxu0
    %869 = vmatpush.bf16.msra.mxu0 %v706
    %870 = vmatpush.bf16.msra.mxu0 %v704
    %871 = vmatpush.bf16.msra.mxu0 %v702
    %872 = vmatpush.bf16.msra.mxu0 %v700
    %873 = vmatpush.bf16.msra.mxu0 %v698
    %874 = vmatpush.bf16.msra.mxu0 %v696
    %875 = vmatpush.bf16.msra.mxu0 %v694
    %876 = vmatpush.bf16.msra.mxu0 %v692
    %877 = vmatmul.bf16.gmra.mxu0 %v380
    %v878 = vpop.f32.mrf.mxu0
    %v879 = vadd.f32 %v865, %v878
    %v880 = vpop.f32.mrf.mxu0
    %v881 = vadd.f32 %v867, %v880
    %882 = vdwg.mxu0
    %v883 = vmax.f32 %v823, 0.0
    %v884 = vmax.f32 %v879, 0.0
    %v885 = vmax.f32 %v825, 0.0
    %v886 = vmax.f32 %v881, 0.0
    %v887 = vpack.c.bf16 %v885, %v883
    %v888 = vpack.c.bf16 %v886, %v884
    %v889 = vld [vmem:[#allocation10] sm:$0xf]
    %v890 = vld [vmem:[#allocation10 + $0x4] sm:$0xf]
    %v891 = vld [vmem:[#allocation10 + $0x8] sm:$0xf]
    %v892 = vld [vmem:[#allocation10 + $0xc] sm:$0xf]
    %v893 = vld [vmem:[#allocation10 + $0x10] sm:$0xf]
    %v894 = vld [vmem:[#allocation10 + $0x14] sm:$0xf]
    %v895 = vld [vmem:[#allocation10 + $0x18] sm:$0xf]
    %v896 = vld [vmem:[#allocation10 + $0x1c] sm:$0xf]
    %v897 = vld [vmem:[#allocation10 + $0x20] sm:$0xf]
    %v898 = vld [vmem:[#allocation10 + $0x24] sm:$0xf]
    %v899 = vld [vmem:[#allocation10 + $0x28] sm:$0xf]
    %v900 = vld [vmem:[#allocation10 + $0x2c] sm:$0xf]
    %v901 = vld [vmem:[#allocation10 + $0x30] sm:$0xf]
    %v902 = vld [vmem:[#allocation10 + $0x34] sm:$0xf]
    %v903 = vld [vmem:[#allocation10 + $0x38] sm:$0xf]
    %v904 = vld [vmem:[#allocation10 + $0x3c] sm:$0xf]
    %v905 = vld [vmem:[#allocation10 + $0x40] sm:$0xf]
    %v906 = vld [vmem:[#allocation10 + $0x44] sm:$0xf]
    %v907 = vld [vmem:[#allocation10 + $0x48] sm:$0xf]
    %v908 = vld [vmem:[#allocation10 + $0x4c] sm:$0xf]
    %v909 = vld [vmem:[#allocation10 + $0x50] sm:$0xf]
    %v910 = vld [vmem:[#allocation10 + $0x54] sm:$0xf]
    %v911 = vld [vmem:[#allocation10 + $0x58] sm:$0xf]
    %v912 = vld [vmem:[#allocation10 + $0x5c] sm:$0xf]
    %v913 = vld [vmem:[#allocation10 + $0x60] sm:$0xf]
    %v914 = vld [vmem:[#allocation10 + $0x64] sm:$0xf]
    %v915 = vld [vmem:[#allocation10 + $0x68] sm:$0xf]
    %v916 = vld [vmem:[#allocation10 + $0x6c] sm:$0xf]
    %v917 = vld [vmem:[#allocation10 + $0x70] sm:$0xf]
    %v918 = vld [vmem:[#allocation10 + $0x74] sm:$0xf]
    %v919 = vld [vmem:[#allocation10 + $0x78] sm:$0xf]
    %v920 = vld [vmem:[#allocation10 + $0x7c] sm:$0xf]
    %v921 = vld [vmem:[%s6] sm:$0x1]
    %v923 = vperm.slane %v921, 0
    %v957 = vunpack.c.l.b16 %v889
    %v958 = vunpack.c.l.b16 %v890
    %v959 = vunpack.c.l.b16 %v891
    %v960 = vunpack.c.l.b16 %v892
    %v961 = vunpack.c.l.b16 %v893
    %v962 = vunpack.c.l.b16 %v894
    %v963 = vunpack.c.l.b16 %v895
    %v964 = vunpack.c.l.b16 %v896
    %v965 = vunpack.c.l.b16 %v897
    %v966 = vunpack.c.l.b16 %v898
    %v967 = vunpack.c.l.b16 %v899
    %v968 = vunpack.c.l.b16 %v900
    %v969 = vunpack.c.l.b16 %v901
    %v970 = vunpack.c.l.b16 %v902
    %v971 = vunpack.c.l.b16 %v903
    %v972 = vunpack.c.l.b16 %v904
    %v973 = vunpack.c.l.b16 %v905
    %v974 = vunpack.c.l.b16 %v906
    %v975 = vunpack.c.l.b16 %v907
    %v976 = vunpack.c.l.b16 %v908
    %v977 = vunpack.c.l.b16 %v909
    %v978 = vunpack.c.l.b16 %v910
    %v979 = vunpack.c.l.b16 %v911
    %v980 = vunpack.c.l.b16 %v912
    %v981 = vunpack.c.l.b16 %v913
    %v982 = vunpack.c.l.b16 %v914
    %v983 = vunpack.c.l.b16 %v915
    %v984 = vunpack.c.l.b16 %v916
    %v985 = vunpack.c.l.b16 %v917
    %v986 = vunpack.c.l.b16 %v918
    %v987 = vunpack.c.l.b16 %v919
    %v988 = vunpack.c.l.b16 %v920
    %v989 = vpack.c.b16 %v958, %v957
    %v990 = vpack.c.b16 %v960, %v959
    %v991 = vpack.c.b16 %v962, %v961
    %v992 = vpack.c.b16 %v964, %v963
    %v993 = vpack.c.b16 %v966, %v965
    %v994 = vpack.c.b16 %v968, %v967
    %v995 = vpack.c.b16 %v970, %v969
    %v996 = vpack.c.b16 %v972, %v971
    %v997 = vpack.c.b16 %v974, %v973
    %v998 = vpack.c.b16 %v976, %v975
    %v999 = vpack.c.b16 %v978, %v977
    %v1000 = vpack.c.b16 %v980, %v979
    %v1001 = vpack.c.b16 %v982, %v981
    %v1002 = vpack.c.b16 %v984, %v983
    %v1003 = vpack.c.b16 %v986, %v985
    %v1004 = vpack.c.b16 %v988, %v987
    %1021 = vmatpush.bf16.msra.mxu0 %v996
    %1022 = vmatpush.bf16.msra.mxu0 %v995
    %1023 = vmatpush.bf16.msra.mxu0 %v994
    %1024 = vmatpush.bf16.msra.mxu0 %v993
    %1025 = vmatpush.bf16.msra.mxu0 %v992
    %1026 = vmatpush.bf16.msra.mxu0 %v991
    %1027 = vmatpush.bf16.msra.mxu0 %v990
    %1028 = vmatpush.bf16.msra.mxu0 %v989
    %1029 = vmatmul.bf16.gmra.mxu0 %v887
    %v1030 = vpop.f32.mrf.mxu0
    %v1031 = vadd.f32 %v923, %v1030
    %v1032 = vpop.f32.mrf.mxu0
    %v1033 = vadd.f32 %v923, %v1032
    %1034 = vdwg.mxu0
    %1035 = vmatpush.bf16.msra.mxu0 %v1004
    %1036 = vmatpush.bf16.msra.mxu0 %v1003
    %1037 = vmatpush.bf16.msra.mxu0 %v1002
    %1038 = vmatpush.bf16.msra.mxu0 %v1001
    %1039 = vmatpush.bf16.msra.mxu0 %v1000
    %1040 = vmatpush.bf16.msra.mxu0 %v999
    %1041 = vmatpush.bf16.msra.mxu0 %v998
    %1042 = vmatpush.bf16.msra.mxu0 %v997
    %1043 = vmatmul.bf16.gmra.mxu0 %v888
    %v1044 = vpop.f32.mrf.mxu0
    %v1045 = vadd.f32 %v1031, %v1044
    %v1046 = vpop.f32.mrf.mxu0
    %v1047 = vadd.f32 %v1033, %v1046
    %1048 = vdwg.mxu0
    %1049 = vst [vmem:[#allocation11] sm:$0xff] %v1045
    %1050 = vst [vmem:[#allocation11 + $0x8] sm:$0xff] %v1047
    // Predicated region
    $region50: #{tpu_custom_call.1} parent=1 // pred_check
      _
    $region51: #{tpu_custom_call.1} parent=1 // pred_check_branch
      %1052 = sbr.rel (0) target = $region53
    $region52: #{tpu_custom_call.1} parent=1 // pred_region
      %1054 = vsyncadd [#allocation4], 0
      %s1055 = sshll.u32 [#allocation11], 4
      %s1056 = int_to_ptr.vmem [resolvable:$true] %s1055
      %s1057 = sshll.u32 %s7, 4
      %s1058 = int_to_ptr.hbm [resolvable:$true] %s1057
      %1063 = dma.vmem_to_hbm [thread:$0]  %s1056, 256, %s1058, [#allocation4], 128, 128, 8
    $region53: #{tpu_custom_call.1} parent=1 // pred_fallthru
      _
    // Predicated region
    $region54: #{tpu_custom_call.1} parent=1 // pred_check
      _
    $region55: #{tpu_custom_call.1} parent=1 // pred_check_branch
      %1065 = sbr.rel (0) target = $region57
    $region56: #{tpu_custom_call.1} parent=1 // pred_region
      %1067 = dma.done [#allocation4], 256
    $region57: #{tpu_custom_call.1} parent=1 // pred_fallthru
      _
    %1068 = vsyncpa [#allocation3], 1
    %1069 = vsyncpa [#allocation6], 1
    %1070 = vsyncpa [#allocation9], 1
    %1071 = vsyncpa [#allocation4], 1

</llo_original>
